<compile_context>
chip_gen: v6e
topology: v6e:2x2x1
jax: 0.10.0
libtpu: 0.0.40
codegen_flags: <defaults>
</compile_context>

<pallas_src>
import numpy as np
import jax
import jax.numpy as jnp
from jax import lax
from jax.experimental import pallas as pl
from jax.experimental.pallas import tpu as pltpu


# ----------------------------------------------------------------------------- #
# Helpers
# ----------------------------------------------------------------------------- #
def _get_hw(size):
    """Equivalent of mon.math.get_hw: int -> (s, s), (h, w) -> (h, w)."""
    if isinstance(size, (tuple, list)):
        if len(size) == 1:
            return int(size[0]), int(size[0])
        return int(size[0]), int(size[1])
    return int(size), int(size)


def _nearest_src_indices(out_size: int, in_size: int) -> np.ndarray:
    """PyTorch 'nearest' source-index rule."""
    scale = in_size / out_size
    idx = np.floor(np.arange(out_size, dtype=np.float64) * scale).astype(np.int64)
    return np.minimum(idx, in_size - 1)


def _runs_from_indices(idx: np.ndarray):
    """Group consecutive output rows sharing one source row into (dst, len, src)."""
    runs = []
    start = 0
    n = len(idx)
    for r in range(1, n + 1):
        if r == n or idx[r] != idx[start]:
            runs.append((start, r - start, int(idx[start])))
            start = r
    return runs


# ----------------------------------------------------------------------------- #
# Kernels
# ----------------------------------------------------------------------------- #
_STATIC_GATHER_MAX = 128  # fully unroll the H gather with static indices below this


def _make_down_kernel(h_idx: np.ndarray, h_in: int, h_out: int, compute_dtype):
    """h_out <= h_in: gather the needed H rows first, then one folded W matmul."""
    static_gather = h_out <= _STATIC_GATHER_MAX
    h_idx_static = [int(v) for v in h_idx]

    def kernel(hidx_ref, x_ref, sw_ref, o_ref, xs_ref):
        # hidx_ref: SMEM (h_out,) int32  -- prefetched source-row indices
        # x_ref   : VMEM (B, h_in, w_in)
        # sw_ref  : VMEM (w_in, w_out)   -- one-hot lane-gather matrix (resident)
        # o_ref   : VMEM (B, h_out, w_out)
        # xs_ref  : VMEM (B, h_out, w_in) scratch, compute dtype
        bb = x_ref.shape[0]
        w_in = x_ref.shape[2]
        w_out = o_ref.shape[2]

        # 1) H gather (sublane axis): copy only the needed rows.
        # TODO(synk): for bf16 inputs pair/group row copies to avoid RMW stores.
        if static_gather:
            for r, src in enumerate(h_idx_static):
                xs_ref[:, pl.ds(r, 1), :] = (
                    x_ref[:, pl.ds(src, 1), :].astype(xs_ref.dtype))
        else:
            def body(r, carry):
                src = hidx_ref[r]
                xs_ref[:, pl.ds(r, 1), :] = (
                    x_ref[:, pl.ds(src, 1), :].astype(xs_ref.dtype))
                return carry
            lax.fori_loop(0, h_out, body, 0, unroll=8)

        # 2) W gather (lane axis): one MXU matmul, batch+H folded into M.
        lhs = xs_ref[...].reshape(bb * h_out, w_in)
        y = jnp.dot(lhs, sw_ref[...], preferred_element_type=jnp.float32)
        o_ref[...] = y.reshape(bb, h_out, w_out).astype(o_ref.dtype)

    return kernel


def _make_up_kernel(h_idx: np.ndarray, h_in: int, h_out: int, compute_dtype):
    """h_out > h_in: W matmul on the raw input rows first (M = B*h_in), then
    replicate rows for the H axis with statically grouped run copies."""
    runs = _runs_from_indices(h_idx)  # <= h_in runs, known at trace time

    def kernel(hidx_ref, x_ref, sw_ref, o_ref, ys_ref):
        # ys_ref: VMEM (B, h_in, w_out) scratch, compute dtype
        bb = x_ref.shape[0]
        w_in = x_ref.shape[2]
        w_out = o_ref.shape[2]

        # 1) W gather on the *input* rows (h_in x fewer FLOPs than gathering first).
        lhs = x_ref[...].astype(compute_dtype).reshape(bb * h_in, w_in)
        y = jnp.dot(lhs, sw_ref[...], preferred_element_type=jnp.float32)
        ys_ref[...] = y.reshape(bb, h_in, w_out).astype(ys_ref.dtype)

        # 2) H replication: one grouped store per run of repeated output rows.
        for dst, length, src in runs:
            row = ys_ref[:, pl.ds(src, 1), :]                       # (B, 1, w_out)
            o_ref[:, pl.ds(dst, length), :] = jnp.broadcast_to(
                row, (row.shape[0], length, row.shape[2])).astype(o_ref.dtype)

    return kernel


# ----------------------------------------------------------------------------- #
# Block sizing / VMEM budgeting
# ----------------------------------------------------------------------------- #
def _vmem_capacity_bytes() -> int:
    cap = 64 << 20  # conservative fallback (v7x physical per-core VMEM)
    try:
        info = pltpu.get_tpu_info()
        for attr in ("vmem_capacity_bytes", "vmem_bytes", "vmem_size_bytes"):
            v = getattr(info, attr, None)
            if v:
                cap = int(v)
                break
    except Exception:
        pass
    return cap


def _choose_batch_block(nc, h_in, w_in, h_out, w_out, in_esize, out_esize,
                        csize, upsample, budget_bytes):
    """Largest batch block fitting the VMEM budget; grid kept >= 2 steps."""
    per_b = 2 * h_in * w_in * in_esize            # input block   (double buffered)
    per_b += 2 * h_out * w_out * out_esize        # output block  (double buffered)
    if upsample:
        per_b += h_in * w_out * csize             # ys scratch    (single buffered)
        per_b += h_in * w_out * 4                 # f32 matmul result temp
        per_b += h_in * w_in * csize              # possible lhs cast temp
    else:
        per_b += h_out * w_in * csize             # xs scratch    (single buffered)
        per_b += h_out * w_out * 4                # f32 matmul result temp
    fixed = 2 * w_in * w_out * csize              # S_w (counted double buffered)
    fixed += 2 << 20                              # compiler / internal headroom

    avail = max(budget_bytes - fixed, per_b)
    b = int(max(1, min(avail // max(per_b, 1), nc)))
    if nc > 1:
        # v7x has 2 TensorCores: keep at least 2 grid steps under "parallel".
        b = min(b, pl.cdiv(nc, 2))
    b = max(1, b)
    return b, fixed + b * per_b


# ----------------------------------------------------------------------------- #
# Public entry point
# ----------------------------------------------------------------------------- #
def interpolate(x: jax.Array, size) -> jax.Array:
    """Nearest-neighbor resize of an NCHW tensor `x` to spatial `size`."""
    h_out, w_out = _get_hw(size)
    n, c, h_in, w_in = x.shape
    nc = n * c

    # Compute dtype: bf16 stays bf16, f32 stays f32 (one-hot selection is exact).
    if x.dtype in (jnp.bfloat16, jnp.float32):
        compute_dtype = x.dtype
    else:
        # TODO(synk): integer inputs round-trip through f32 (exact only for |v| < 2**24).
        compute_dtype = jnp.float32

    # Static nearest-neighbor source indices.
    h_idx = _nearest_src_indices(h_out, h_in)
    w_idx = _nearest_src_indices(w_out, w_in)
    upsample = h_out > h_in

    # One-hot lane-gather matrix for the W axis (H uses row copies / replication).
    s_w = np.zeros((w_in, w_out), dtype=np.float32)
    s_w[w_idx, np.arange(w_out)] = 1.0
    s_w = jnp.asarray(s_w, dtype=compute_dtype)
    h_idx_dev = jnp.asarray(h_idx, dtype=jnp.int32)

    in_esize = jnp.dtype(x.dtype).itemsize
    out_esize = in_esize
    csize = jnp.dtype(compute_dtype).itemsize

    cap = _vmem_capacity_bytes()
    budget = min(int(cap * 0.33), 36 << 20)       # v7x ~21 MiB, v5e/v6e 36 MiB
    b_blk, est_bytes = _choose_batch_block(
        nc, h_in, w_in, h_out, w_out, in_esize, out_esize, csize, upsample, budget)
    vmem_limit = min(cap - (2 << 20), max(est_bytes + (8 << 20), 32 << 20))

    x_flat = x.reshape(nc, h_in, w_in)
    grid = (pl.cdiv(nc, b_blk),)

    h_mid = min(h_in, h_out)
    flops = 2 * nc * h_mid * w_in * w_out
    bytes_accessed = (nc * h_in * w_in * in_esize
                      + nc * h_out * w_out * out_esize
                      + w_in * w_out * csize)

    if upsample:
        kernel = _make_up_kernel(h_idx, h_in, h_out, compute_dtype)
        scratch = pltpu.VMEM((b_blk, h_in, w_out), compute_dtype)
    else:
        kernel = _make_down_kernel(h_idx, h_in, h_out, compute_dtype)
        scratch = pltpu.VMEM((b_blk, h_out, w_in), compute_dtype)

    out = pl.pallas_call(
        kernel,
        out_shape=jax.ShapeDtypeStruct((nc, h_out, w_out), x.dtype),
        grid_spec=pltpu.PrefetchScalarGridSpec(
            num_scalar_prefetch=1,
            grid=grid,
            in_specs=[
                pl.BlockSpec((b_blk, h_in, w_in), lambda i, hidx: (i, 0, 0)),
                pl.BlockSpec((w_in, w_out), lambda i, hidx: (0, 0)),
            ],
            out_specs=pl.BlockSpec((b_blk, h_out, w_out), lambda i, hidx: (i, 0, 0)),
            scratch_shapes=[scratch],
        ),
        compiler_params=pltpu.CompilerParams(
            dimension_semantics=("parallel",),
            vmem_limit_bytes=int(vmem_limit),
        ),
        cost_estimate=pl.CostEstimate(
            flops=int(flops),
            transcendentals=0,
            bytes_accessed=int(bytes_accessed),
        ),
    )(h_idx_dev, x_flat, s_w)

    return out.reshape(n, c, h_out, w_out)


class Interpolate:
    """JAX/Pallas analogue of the PyTorch Interpolate module."""

    def __init__(self, size):
        self.size = _get_hw(size)

    def __call__(self, x: jax.Array) -> jax.Array:
        return interpolate(x, self.size)


# ----------------------------------------------------------------------------- #
# Demo / correctness check
# ----------------------------------------------------------------------------- #
if __name__ == "__main__":
    key = jax.random.PRNGKey(0)
    x = jax.random.normal(key, (2, 4, 16, 16), dtype=jnp.float32)
    xnp = np.asarray(x)

    # Downsample path: 16x16 -> 8x8.
    layer_dn = Interpolate(size=8)
    y_dn = jax.block_until_ready(layer_dn(x))
    hi = _nearest_src_indices(8, 16)
    wi = _nearest_src_indices(8, 16)
    y_dn_ref = xnp[:, :, hi, :][:, :, :, wi]
    assert y_dn.shape == (2, 4, 8, 8)
    np.testing.assert_allclose(np.asarray(y_dn), y_dn_ref, rtol=0, atol=0)

    # Upsample path: 16x16 -> 24x24 (exercises matmul-first + row replication).
    layer_up = Interpolate(size=(24, 24))
    y_up = jax.block_until_ready(layer_up(x))
    hi_u = _nearest_src_indices(24, 16)
    wi_u = _nearest_src_indices(24, 16)
    y_up_ref = xnp[:, :, hi_u, :][:, :, :, wi_u]
    assert y_up.shape == (2, 4, 24, 24)
    np.testing.assert_allclose(np.asarray(y_up), y_up_ref, rtol=0, atol=0)

    print("KERNEL_OK")
</pallas_src>

<mosaic_0001>
module attributes {stable_mosaic.version = 11 : i64} {
  func.func @kernel(%arg0: i32, %arg1: memref<8xi32, #tpu.memory_space<smem>>, %arg2: memref<4x16x16xf32, #tpu.memory_space<vmem>>, %arg3: memref<16x8xf32, #tpu.memory_space<vmem>>, %arg4: memref<4x8x8xf32, #tpu.memory_space<vmem>>, %arg5: memref<4x8x16xf32, #tpu.memory_space<vmem>>) attributes {dimension_semantics = [#tpu.dimension_semantics<parallel>], iteration_bounds = array<i64: 2>, scalar_prefetch = 1 : i64, scratch_operands = 1 : i64, tpu.core_type = #tpu.core_type<tc>, window_params = [{transform_indices = @transform_0, window_bounds = array<i64: 4, 16, 16>}, {pipeline_mode = #tpu.pipeline_mode<synchronous>, transform_indices = @transform_1, window_bounds = array<i64: 16, 8>}, {transform_indices = @transform_2, window_bounds = array<i64: 4, 8, 8>}]} {
    %c0 = arith.constant 0 : index
    %c0_0 = arith.constant 0 : index
    %c0_1 = arith.constant 0 : index
    %0 = vector.load %arg2[%c0, %c0_0, %c0_1] : memref<4x16x16xf32, #tpu.memory_space<vmem>>, vector<4x1x16xf32>
    %c0_2 = arith.constant 0 : index
    %c0_3 = arith.constant 0 : index
    %c0_4 = arith.constant 0 : index
    %1 = vector.load %arg5[%c0_2, %c0_3, %c0_4] : memref<4x8x16xf32, #tpu.memory_space<vmem>>, vector<4x1x16xf32>
    tpu.vector_store %arg5[%c0_2, %c0_3, %c0_4], %0 {strides = array<i32>} : memref<4x8x16xf32, #tpu.memory_space<vmem>>, vector<4x1x16xf32>,
    %c0_5 = arith.constant 0 : index
    %c2 = arith.constant 2 : index
    %c0_6 = arith.constant 0 : index
    %2 = vector.load %arg2[%c0_5, %c2, %c0_6] : memref<4x16x16xf32, #tpu.memory_space<vmem>>, vector<4x1x16xf32>
    %c0_7 = arith.constant 0 : index
    %c1 = arith.constant 1 : index
    %c0_8 = arith.constant 0 : index
    %3 = vector.load %arg5[%c0_7, %c1, %c0_8] : memref<4x8x16xf32, #tpu.memory_space<vmem>>, vector<4x1x16xf32>
    tpu.vector_store %arg5[%c0_7, %c1, %c0_8], %2 {strides = array<i32>} : memref<4x8x16xf32, #tpu.memory_space<vmem>>, vector<4x1x16xf32>,
    %c0_9 = arith.constant 0 : index
    %c4 = arith.constant 4 : index
    %c0_10 = arith.constant 0 : index
    %4 = vector.load %arg2[%c0_9, %c4, %c0_10] : memref<4x16x16xf32, #tpu.memory_space<vmem>>, vector<4x1x16xf32>
    %c0_11 = arith.constant 0 : index
    %c2_12 = arith.constant 2 : index
    %c0_13 = arith.constant 0 : index
    %5 = vector.load %arg5[%c0_11, %c2_12, %c0_13] : memref<4x8x16xf32, #tpu.memory_space<vmem>>, vector<4x1x16xf32>
    tpu.vector_store %arg5[%c0_11, %c2_12, %c0_13], %4 {strides = array<i32>} : memref<4x8x16xf32, #tpu.memory_space<vmem>>, vector<4x1x16xf32>,
    %c0_14 = arith.constant 0 : index
    %c6 = arith.constant 6 : index
    %c0_15 = arith.constant 0 : index
    %6 = vector.load %arg2[%c0_14, %c6, %c0_15] : memref<4x16x16xf32, #tpu.memory_space<vmem>>, vector<4x1x16xf32>
    %c0_16 = arith.constant 0 : index
    %c3 = arith.constant 3 : index
    %c0_17 = arith.constant 0 : index
    %7 = vector.load %arg5[%c0_16, %c3, %c0_17] : memref<4x8x16xf32, #tpu.memory_space<vmem>>, vector<4x1x16xf32>
    tpu.vector_store %arg5[%c0_16, %c3, %c0_17], %6 {strides = array<i32>} : memref<4x8x16xf32, #tpu.memory_space<vmem>>, vector<4x1x16xf32>,
    %c0_18 = arith.constant 0 : index
    %c8 = arith.constant 8 : index
    %c0_19 = arith.constant 0 : index
    %8 = vector.load %arg2[%c0_18, %c8, %c0_19] : memref<4x16x16xf32, #tpu.memory_space<vmem>>, vector<4x1x16xf32>
    %c0_20 = arith.constant 0 : index
    %c4_21 = arith.constant 4 : index
    %c0_22 = arith.constant 0 : index
    %9 = vector.load %arg5[%c0_20, %c4_21, %c0_22] : memref<4x8x16xf32, #tpu.memory_space<vmem>>, vector<4x1x16xf32>
    tpu.vector_store %arg5[%c0_20, %c4_21, %c0_22], %8 {strides = array<i32>} : memref<4x8x16xf32, #tpu.memory_space<vmem>>, vector<4x1x16xf32>,
    %c0_23 = arith.constant 0 : index
    %c10 = arith.constant 10 : index
    %c0_24 = arith.constant 0 : index
    %10 = vector.load %arg2[%c0_23, %c10, %c0_24] : memref<4x16x16xf32, #tpu.memory_space<vmem>>, vector<4x1x16xf32>
    %c0_25 = arith.constant 0 : index
    %c5 = arith.constant 5 : index
    %c0_26 = arith.constant 0 : index
    %11 = vector.load %arg5[%c0_25, %c5, %c0_26] : memref<4x8x16xf32, #tpu.memory_space<vmem>>, vector<4x1x16xf32>
    tpu.vector_store %arg5[%c0_25, %c5, %c0_26], %10 {strides = array<i32>} : memref<4x8x16xf32, #tpu.memory_space<vmem>>, vector<4x1x16xf32>,
    %c0_27 = arith.constant 0 : index
    %c12 = arith.constant 12 : index
    %c0_28 = arith.constant 0 : index
    %12 = vector.load %arg2[%c0_27, %c12, %c0_28] : memref<4x16x16xf32, #tpu.memory_space<vmem>>, vector<4x1x16xf32>
    %c0_29 = arith.constant 0 : index
    %c6_30 = arith.constant 6 : index
    %c0_31 = arith.constant 0 : index
    %13 = vector.load %arg5[%c0_29, %c6_30, %c0_31] : memref<4x8x16xf32, #tpu.memory_space<vmem>>, vector<4x1x16xf32>
    tpu.vector_store %arg5[%c0_29, %c6_30, %c0_31], %12 {strides = array<i32>} : memref<4x8x16xf32, #tpu.memory_space<vmem>>, vector<4x1x16xf32>,
    %c0_32 = arith.constant 0 : index
    %c14 = arith.constant 14 : index
    %c0_33 = arith.constant 0 : index
    %14 = vector.load %arg2[%c0_32, %c14, %c0_33] : memref<4x16x16xf32, #tpu.memory_space<vmem>>, vector<4x1x16xf32>
    %c0_34 = arith.constant 0 : index
    %c7 = arith.constant 7 : index
    %c0_35 = arith.constant 0 : index
    %15 = vector.load %arg5[%c0_34, %c7, %c0_35] : memref<4x8x16xf32, #tpu.memory_space<vmem>>, vector<4x1x16xf32>
    tpu.vector_store %arg5[%c0_34, %c7, %c0_35], %14 {strides = array<i32>} : memref<4x8x16xf32, #tpu.memory_space<vmem>>, vector<4x1x16xf32>,
    %c0_36 = arith.constant 0 : index
    %c0_37 = arith.constant 0 : index
    %c0_38 = arith.constant 0 : index
    %16 = vector.load %arg5[%c0_36, %c0_37, %c0_38] : memref<4x8x16xf32, #tpu.memory_space<vmem>>, vector<4x8x16xf32>
    %17 = vector.shape_cast %16 : vector<4x8x16xf32> to vector<32x16xf32>
    %c0_39 = arith.constant 0 : index
    %c0_40 = arith.constant 0 : index
    %18 = vector.load %arg3[%c0_39, %c0_40] : memref<16x8xf32, #tpu.memory_space<vmem>>, vector<16x8xf32>
    %cst = arith.constant dense<0.000000e+00> : vector<32x8xf32>
    %19 = tpu.matmul %17, %18, %cst {dimension_numbers = #tpu.dot_dimension_numbers<[1], [0], [0], [1], [0, 0, 1, 1], [], []>} : vector<32x16xf32>, vector<16x8xf32>, vector<32x8xf32> -> vector<32x8xf32>
    %20 = vector.shape_cast %19 : vector<32x8xf32> to vector<4x8x8xf32>
    %c0_41 = arith.constant 0 : index
    %c0_42 = arith.constant 0 : index
    %c0_43 = arith.constant 0 : index
    %21 = vector.load %arg4[%c0_41, %c0_42, %c0_43] : memref<4x8x8xf32, #tpu.memory_space<vmem>>, vector<4x8x8xf32>
    tpu.vector_store %arg4[%c0_41, %c0_42, %c0_43], %20 {strides = array<i32>} : memref<4x8x8xf32, #tpu.memory_space<vmem>>, vector<4x8x8xf32>,
    return
  }
  func.func @transform_0(%arg0: i32, %arg1: memref<8xi32, #tpu.memory_space<smem>>) -> (i32, i32, i32) {
    %c0_i32 = arith.constant 0 : i32
    %c0_i32_0 = arith.constant 0 : i32
    %c0_i32_1 = arith.constant 0 : i32
    return %arg0, %c0_i32, %c0_i32_0 : i32, i32, i32
  }
  func.func @transform_1(%arg0: i32, %arg1: memref<8xi32, #tpu.memory_space<smem>>) -> (i32, i32) {
    %c0_i32 = arith.constant 0 : i32
    %c0_i32_0 = arith.constant 0 : i32
    %c0_i32_1 = arith.constant 0 : i32
    return %c0_i32, %c0_i32_0 : i32, i32
  }
  func.func @transform_2(%arg0: i32, %arg1: memref<8xi32, #tpu.memory_space<smem>>) -> (i32, i32, i32) {
    %c0_i32 = arith.constant 0 : i32
    %c0_i32_0 = arith.constant 0 : i32
    %c0_i32_1 = arith.constant 0 : i32
    return %arg0, %c0_i32, %c0_i32_0 : i32, i32, i32
  }
}

</mosaic_0001>

<llo_original>
// kernel: tpu_custom_call.1
$region0: #{tpu_custom_call.1}
  #allocation0 [shape = 'u32[]', space=smem, size = 0x4, offset = 0x4, fixed_abs, tag = 'smem constant byte address 0x4 - core index']
  #allocation1 [shape = 'u32[144,128]{1,0:T(1,128)}', space=vmem, size = 0x12000, scoped, tag = 'internal scratch']
  #allocation2 [shape = 'f32[4,8,16]{2,1,0:T(8,128)}', space=vmem, size = 0x4000, scoped, tag = 'scratch operand']
  #allocation3 [shape = 's32[1]{0}', space=sflag, size = 0x4, scoped, tag = 'scoped memory for tpu_custom_call.1']
  #allocation4 [shape = 'u8[512]{0}', space=smem, size = 0x200, scoped, tag = 'prefetched SMEM operand 0']
  %s0 = inlined_call_operand.vmem [shape: s32[8], index: 0, kind: input, shape index: {}]
  %s1 = inlined_call_operand.hbm [shape: f32[8,16,16], index: 1, kind: input, shape index: {}]
  %s2 = inlined_call_operand.vmem [shape: f32[16,8], index: 2, kind: input, shape index: {}]
  %s3 = inlined_call_operand.hbm [shape: f32[8,8,8], index: 3, kind: output, shape index: {}]
  %s4 = sld [smem:[#allocation0]]
  $region45: #{tpu_custom_call.1} parent=0
    _
  %s6 = ssub.s32 1, %s4
  %s7 = scalar_select 0, %s6, %s4
  %s8 = sshll.u32 %s0, 4
  %s9 = int_to_ptr.vmem [resolvable:$true] %s8
  %11 = dma.vmem_to_smem %s9, 16, [#allocation4], [#allocation3]
  %12 = dma.done [#allocation3], 16
  %13 = sfence
  $region1: #{tpu_custom_call.1} parent=0
    #allocation5 [shape = 'u8[65536]{0}', space=vmem, size = 0x10000, scoped, tag = 'input window, operand 1']
    #allocation6 [shape = 's32[2]{0}', space=sflag, size = 0x8, scoped, tag = 'scoped memory for tpu_custom_call.1']
    #allocation7 [shape = 's32[2]{0}', space=sflag, size = 0x8, scoped, tag = 'scoped memory for tpu_custom_call.1']
    #allocation8 [shape = 'u8[32768]{0}', space=vmem, size = 0x8000, scoped, tag = 'output window, operand 0']
    %14 = vsyncpa [#allocation6], 0
    %s15 = scalar_lea.sflag [#allocation6], 1
    %16 = vsyncpa %s15, 0
    %17 = vsyncpa [#allocation7], 0
    %s18 = scalar_lea.sflag [#allocation7], 1
    %19 = vsyncpa %s18, 0
    loop: start=0, step=1, limit=4
    $region2: #{tpu_custom_call.1} parent=1 // loop_pre_header
      _
    $region3: #{tpu_custom_call.1} parent=1 // loop_header
      %s21 = sphi 0, %s25
      %p22 = scmp.ge.s32.totalorder %s21, 4
      %s31 = sphi 0, %s33
      %s34 = sphi 0, %s31
      %s35 = sphi 0, %s34
      %s51 = sphi 0, %s35
      %s55 = sphi 0, %s55
      %s57 = sphi 0, %s55
      %s58 = sphi 0, %s57
      %s72 = sphi 0, %s58
      %s78 = sphi 0, %s80
      %s81 = sphi 0, %s78
      %s82 = sphi 0, %s81
      %s98 = sphi 0, %s82
    $region4: #{tpu_custom_call.1} parent=1 // loop_header_branch
      %24 = sbr.rel (%p22) target = $region8
    $region5: #{tpu_custom_call.1} parent=1 // loop_body
      %s26 = ssub.s32 %s21, 1
      %s27 = ssub.s32 %s21, 2
      %s28 = sadd.s32 %s21, 1
      %s29 = ssub.s32 %s21, %s28
      %p30 = scmp.eq.s32.totalorder %s29, 0
      %s32 = sadd.s32 %s31, 1
      %s33 = scalar_select %p30, %s31, %s32
      %p36 = pneg %p30
      %p37 = scmp.eq.s32.totalorder %s21, 1
      %p38 = por %p36, %p37
      %p39 = scmp.ne.s32.totalorder %s31, %s34
      %p40 = scmp.eq.s32.totalorder %s21, 0
      %p41 = por %p39, %p40
      %p42 = scmp.ne.s32.totalorder %s31, %s34
      %p43 = scmp.eq.s32.totalorder %s26, 1
      %p44 = por %p42, %p43
      %p45 = scmp.ne.s32.totalorder %s34, %s35
      %p46 = scmp.eq.s32.totalorder %s26, 0
      %p47 = por %p45, %p46
      %p48 = scmp.ne.s32.totalorder %s34, %s35
      %p49 = scmp.eq.s32.totalorder %s27, 1
      %p50 = por %p48, %p49
      %p52 = scmp.ne.s32.totalorder %s35, %s51
      %p53 = scmp.eq.s32.totalorder %s27, 0
      %p54 = por %p52, %p53
      %s56 = sadd.s32 %s55, 1
      %p59 = scmp.eq.s32.totalorder %s21, 1
      %p60 = scmp.ne.s32.totalorder %s55, %s57
      %p61 = scmp.eq.s32.totalorder %s21, 0
      %p62 = por %p60, %p61
      %p63 = scmp.ne.s32.totalorder %s55, %s57
      %p64 = scmp.eq.s32.totalorder %s26, 1
      %p65 = por %p63, %p64
      %p66 = scmp.ne.s32.totalorder %s57, %s58
      %p67 = scmp.eq.s32.totalorder %s26, 0
      %p68 = por %p66, %p67
      %p69 = scmp.ne.s32.totalorder %s57, %s58
      %p70 = scmp.eq.s32.totalorder %s27, 1
      %p71 = por %p69, %p70
      %p73 = scmp.ne.s32.totalorder %s58, %s72
      %p74 = scmp.eq.s32.totalorder %s27, 0
      %p75 = por %p73, %p74
      %s76 = ssub.s32 %s21, %s28
      %p77 = scmp.eq.s32.totalorder %s76, 0
      %s79 = sadd.s32 %s78, 1
      %s80 = scalar_select %p77, %s78, %s79
      %p83 = pneg %p77
      %p84 = scmp.eq.s32.totalorder %s21, 1
      %p85 = por %p83, %p84
      %p86 = scmp.ne.s32.totalorder %s78, %s81
      %p87 = scmp.eq.s32.totalorder %s21, 0
      %p88 = por %p86, %p87
      %p89 = scmp.ne.s32.totalorder %s78, %s81
      %p90 = scmp.eq.s32.totalorder %s26, 1
      %p91 = por %p89, %p90
      %p92 = scmp.ne.s32.totalorder %s81, %s82
      %p93 = scmp.eq.s32.totalorder %s26, 0
      %p94 = por %p92, %p93
      %p95 = scmp.ne.s32.totalorder %s81, %s82
      %p96 = scmp.eq.s32.totalorder %s27, 1
      %p97 = por %p95, %p96
      %p99 = scmp.ne.s32.totalorder %s82, %s98
      %p100 = scmp.eq.s32.totalorder %s27, 0
      %p101 = por %p99, %p100
      %p102 = scmp.le.s32.totalorder 1, %s21
      %p103 = scmp.lt.s32.totalorder %s21, 3
      %p104 = pnand %p102, %p103
      %p105 = pneg %p104
      // Predicated region
      $region9: #{tpu_custom_call.1} parent=5 // pred_check
        _
      $region10: #{tpu_custom_call.1} parent=5 // pred_check_branch
        %107 = sbr.rel (%p104) target = $region12
      $region11: #{tpu_custom_call.1} parent=5 // pred_region
        %s108 = ssub.s32 %s21, 1
        // Predicated region
        $region13: #{tpu_custom_call.1} parent=11 // pred_check
          %p109 = pneg %p68
        $region14: #{tpu_custom_call.1} parent=11 // pred_check_branch
          %111 = sbr.rel (%p109) target = $region16
        $region15: #{tpu_custom_call.1} parent=11 // pred_region
          _
        $region16: #{tpu_custom_call.1} parent=11 // pred_fallthru
          _
      $region12: #{tpu_custom_call.1} parent=5 // pred_fallthru
        _
      %p112 = scmp.lt.s32.totalorder %s21, 2
      // Predicated region
      $region17: #{tpu_custom_call.1} parent=5 // pred_check
        %p113 = pneg %p112
      $region18: #{tpu_custom_call.1} parent=5 // pred_check_branch
        %115 = sbr.rel (%p113) target = $region20
      $region19: #{tpu_custom_call.1} parent=5 // pred_region
        // Predicated region
        $region21: #{tpu_custom_call.1} parent=19 // pred_check
          %p116 = pneg %p41
        $region22: #{tpu_custom_call.1} parent=19 // pred_check_branch
          %118 = sbr.rel (%p116) target = $region24
        $region23: #{tpu_custom_call.1} parent=19 // pred_region
          %s119 = sand.u32 %s31, 1
          %s120 = scalar_lea.sflag [#allocation6], %s119
          %s121 = sand.u32 %s31, 1
          %s122 = smul.addr %s121, 64
          %s123 = scalar_lea.vmem [#allocation5], %s122
          %s124 = smul.u32 4, %s21
          %s126 = ssub.s32 1024, 1024
          %127 = vsyncadd %s120, %s126
          %s128 = smul.addr %s124, 2
          %s129 = smul.addr %s128, 128
          %s130 = scalar_lea.hbm %s1, %s129
          %s131 = sshll.u32 %s123, 4
          %s132 = int_to_ptr.vmem [resolvable:$true] %s131
          %137 = dma.hbm_to_vmem [thread:$0]  %s130, 1024, %s132, %s120, 128, 128, 8
        $region24: #{tpu_custom_call.1} parent=19 // pred_fallthru
          _
      $region20: #{tpu_custom_call.1} parent=5 // pred_fallthru
        _
      %p138 = scmp.le.s32.totalorder 1, %s21
      %p139 = scmp.lt.s32.totalorder %s21, 3
      %p140 = pnand %p138, %p139
      %p141 = pneg %p140
      // Predicated region
      $region25: #{tpu_custom_call.1} parent=5 // pred_check
        _
      $region26: #{tpu_custom_call.1} parent=5 // pred_check_branch
        %143 = sbr.rel (%p140) target = $region28
      $region27: #{tpu_custom_call.1} parent=5 // pred_region
        %s144 = ssub.s32 %s21, 1
        %s145 = sand.u32 %s34, 1
        %s146 = scalar_lea.sflag [#allocation6], %s145
        %s147 = sand.u32 %s34, 1
        %s148 = smul.addr %s147, 64
        %s149 = scalar_lea.vmem [#allocation5], %s148
        // Predicated region
        $region29: #{tpu_custom_call.1} parent=27 // pred_check
          %p150 = pneg %p47
        $region30: #{tpu_custom_call.1} parent=27 // pred_check_branch
          %152 = sbr.rel (%p150) target = $region32
        $region31: #{tpu_custom_call.1} parent=27 // pred_region
          %153 = dma.done %s146, 1024
        $region32: #{tpu_custom_call.1} parent=27 // pred_fallthru
          _
        %s154 = sand.u32 %s34, 1
        %s155 = scalar_lea.sflag [#allocation6], %s154
        %s156 = sand.u32 %s34, 1
        %s157 = smul.addr %s156, 64
        %s158 = scalar_lea.vmem [#allocation5], %s157
        %p159 = pneg %p47
        %p160 = pneg %p44
        %p161 = pneg %p68
        %p162 = pneg %p65
        %p163 = pneg %p94
        %p164 = pneg %p91
        %s165 = sand.u32 %s81, 1
        %s166 = scalar_lea.sflag [#allocation7], %s165
        %s167 = sand.u32 %s81, 1
        %s168 = smul.addr %s167, 32
        %s169 = scalar_lea.vmem [#allocation8], %s168
        %s170 = smul.u32 4, %s26
        %s171 = smul.u32 4, %s26
        %v172 = vld [vmem:[%s149] sm:$0x1]
        %v173 = vld [vmem:[%s149 + $0x10] sm:$0x1]
        %v174 = vld [vmem:[%s149 + $0x20] sm:$0x1]
        %v175 = vld [vmem:[%s149 + $0x30] sm:$0x1]
        %vm176 = vcmask 122880
        %177 = vst.msk [vmem:[#allocation2] sm:$0x1] %vm176, %v172
        %178 = vst.msk [vmem:[#allocation2 + $0x8] sm:$0x1] %vm176, %v173
        %179 = vst.msk [vmem:[#allocation2 + $0x10] sm:$0x1] %vm176, %v174
        %180 = vst.msk [vmem:[#allocation2 + $0x18] sm:$0x1] %vm176, %v175
        %v181 = vld [vmem:[%s149 + $0x2] sm:$0x1]
        %v182 = vld [vmem:[%s149 + $0x12] sm:$0x1]
        %v183 = vld [vmem:[%s149 + $0x22] sm:$0x1]
        %v184 = vld [vmem:[%s149 + $0x32] sm:$0x1]
        %185 = vst.msk [vmem:[#allocation2 + $0x1] sm:$0x1] %vm176, %v181
        %186 = vst.msk [vmem:[#allocation2 + $0x9] sm:$0x1] %vm176, %v182
        %187 = vst.msk [vmem:[#allocation2 + $0x11] sm:$0x1] %vm176, %v183
        %188 = vst.msk [vmem:[#allocation2 + $0x19] sm:$0x1] %vm176, %v184
        %v189 = vld [vmem:[%s149 + $0x4] sm:$0x1]
        %v190 = vld [vmem:[%s149 + $0x14] sm:$0x1]
        %v191 = vld [vmem:[%s149 + $0x24] sm:$0x1]
        %v192 = vld [vmem:[%s149 + $0x34] sm:$0x1]
        %193 = vst.msk [vmem:[#allocation2 + $0x2] sm:$0x1] %vm176, %v189
        %194 = vst.msk [vmem:[#allocation2 + $0xa] sm:$0x1] %vm176, %v190
        %195 = vst.msk [vmem:[#allocation2 + $0x12] sm:$0x1] %vm176, %v191
        %196 = vst.msk [vmem:[#allocation2 + $0x1a] sm:$0x1] %vm176, %v192
        %v197 = vld [vmem:[%s149 + $0x6] sm:$0x1]
        %v198 = vld [vmem:[%s149 + $0x16] sm:$0x1]
        %v199 = vld [vmem:[%s149 + $0x26] sm:$0x1]
        %v200 = vld [vmem:[%s149 + $0x36] sm:$0x1]
        %201 = vst.msk [vmem:[#allocation2 + $0x3] sm:$0x1] %vm176, %v197
        %202 = vst.msk [vmem:[#allocation2 + $0xb] sm:$0x1] %vm176, %v198
        %203 = vst.msk [vmem:[#allocation2 + $0x13] sm:$0x1] %vm176, %v199
        %204 = vst.msk [vmem:[#allocation2 + $0x1b] sm:$0x1] %vm176, %v200
        %v205 = vld [vmem:[%s149 + $0x8] sm:$0x1]
        %v206 = vld [vmem:[%s149 + $0x18] sm:$0x1]
        %v207 = vld [vmem:[%s149 + $0x28] sm:$0x1]
        %v208 = vld [vmem:[%s149 + $0x38] sm:$0x1]
        %209 = vst.msk [vmem:[#allocation2 + $0x4] sm:$0x1] %vm176, %v205
        %210 = vst.msk [vmem:[#allocation2 + $0xc] sm:$0x1] %vm176, %v206
        %211 = vst.msk [vmem:[#allocation2 + $0x14] sm:$0x1] %vm176, %v207
        %212 = vst.msk [vmem:[#allocation2 + $0x1c] sm:$0x1] %vm176, %v208
        %v213 = vld [vmem:[%s149 + $0xa] sm:$0x1]
        %v214 = vld [vmem:[%s149 + $0x1a] sm:$0x1]
        %v215 = vld [vmem:[%s149 + $0x2a] sm:$0x1]
        %v216 = vld [vmem:[%s149 + $0x3a] sm:$0x1]
        %217 = vst.msk [vmem:[#allocation2 + $0x5] sm:$0x1] %vm176, %v213
        %218 = vst.msk [vmem:[#allocation2 + $0xd] sm:$0x1] %vm176, %v214
        %219 = vst.msk [vmem:[#allocation2 + $0x15] sm:$0x1] %vm176, %v215
        %220 = vst.msk [vmem:[#allocation2 + $0x1d] sm:$0x1] %vm176, %v216
        %v221 = vld [vmem:[%s149 + $0xc] sm:$0x1]
        %v222 = vld [vmem:[%s149 + $0x1c] sm:$0x1]
        %v223 = vld [vmem:[%s149 + $0x2c] sm:$0x1]
        %v224 = vld [vmem:[%s149 + $0x3c] sm:$0x1]
        %225 = vst.msk [vmem:[#allocation2 + $0x6] sm:$0x1] %vm176, %v221
        %226 = vst.msk [vmem:[#allocation2 + $0xe] sm:$0x1] %vm176, %v222
        %227 = vst.msk [vmem:[#allocation2 + $0x16] sm:$0x1] %vm176, %v223
        %228 = vst.msk [vmem:[#allocation2 + $0x1e] sm:$0x1] %vm176, %v224
        %v229 = vld [vmem:[%s149 + $0xe] sm:$0x1]
        %v230 = vld [vmem:[%s149 + $0x1e] sm:$0x1]
        %v231 = vld [vmem:[%s149 + $0x2e] sm:$0x1]
        %v232 = vld [vmem:[%s149 + $0x3e] sm:$0x1]
        %233 = vst.msk [vmem:[#allocation2 + $0x7] sm:$0x1] %vm176, %v229
        %234 = vst.msk [vmem:[#allocation2 + $0xf] sm:$0x1] %vm176, %v230
        %235 = vst.msk [vmem:[#allocation2 + $0x17] sm:$0x1] %vm176, %v231
        %236 = vst.msk [vmem:[#allocation2 + $0x1f] sm:$0x1] %vm176, %v232
        %v237 = vld [vmem:[#allocation2] sm:$0xff]
        %v238 = vld [vmem:[#allocation2 + $0x8] sm:$0xff]
        %v239 = vld [vmem:[#allocation2 + $0x10] sm:$0xff]
        %v240 = vld [vmem:[#allocation2 + $0x18] sm:$0xff]
        %v241 = vld [vmem:[%s2] sm:$0xff]
        %v242 = vld [vmem:[%s2 + $0x8] sm:$0xff]
        %vm243 = vcmask 130048
        %v245 = vsel %vm243, %v237, 0
        %v248 = vsel %vm243, %v238, 0
        %v251 = vsel %vm243, %v239, 0
        %v254 = vsel %vm243, %v240, 0
        %256 = vmatprep.subr.mxu0 0.0
        %257 = vmatpush1.msra.mxu0 0.0
        %258 = vmatprep.subr.mxu0 0.0
        %259 = vmatpush1.msra.mxu0 0.0
        %260 = vmatprep.subr.mxu0 0.0
        %261 = vmatpush1.msra.mxu0 0.0
        %262 = vmatprep.subr.mxu0 0.0
        %263 = vmatpush1.msra.mxu0 0.0
        %264 = vmatprep.subr.mxu0 0.0
        %265 = vmatpush1.msra.mxu0 0.0
        %266 = vmatprep.subr.mxu0 0.0
        %267 = vmatpush1.msra.mxu0 0.0
        %268 = vmatprep.subr.mxu0 0.0
        %269 = vmatpush1.msra.mxu0 0.0
        %270 = vmatprep.subr.mxu0 0.0
        %271 = vmatpush1.msra.mxu0 0.0
        %272 = vmatprep.subr.mxu0 0.0
        %273 = vmatpush1.msra.mxu0 0.0
        %274 = vmatprep.subr.mxu0 0.0
        %275 = vmatpush1.msra.mxu0 0.0
        %276 = vmatprep.subr.mxu0 0.0
        %277 = vmatpush1.msra.mxu0 0.0
        %278 = vmatprep.subr.mxu0 0.0
        %279 = vmatpush1.msra.mxu0 0.0
        %280 = vmatprep.subr.mxu0 0.0
        %281 = vmatpush1.msra.mxu0 0.0
        %282 = vmatprep.subr.mxu0 0.0
        %283 = vmatpush1.msra.mxu0 0.0
        %284 = vmatprep.subr.mxu0 0.0
        %285 = vmatpush1.msra.mxu0 %v242
        %286 = vmatprep.subr.mxu0 0.0
        %287 = vmatpush1.msra.mxu0 %v241
        %288 = vmatprep.subr.mxu0 0.0
        %289 = vmatpush2.msra.mxu0 0.0
        %290 = vmatprep.subr.mxu0 0.0
        %291 = vmatpush2.msra.mxu0 0.0
        %292 = vmatprep.subr.mxu0 0.0
        %293 = vmatpush2.msra.mxu0 0.0
        %294 = vmatprep.subr.mxu0 0.0
        %295 = vmatpush2.msra.mxu0 0.0
        %296 = vmatprep.subr.mxu0 0.0
        %297 = vmatpush2.msra.mxu0 0.0
        %298 = vmatprep.subr.mxu0 0.0
        %299 = vmatpush2.msra.mxu0 0.0
        %300 = vmatprep.subr.mxu0 0.0
        %301 = vmatpush2.msra.mxu0 0.0
        %302 = vmatprep.subr.mxu0 0.0
        %303 = vmatpush2.msra.mxu0 0.0
        %304 = vmatprep.subr.mxu0 0.0
        %305 = vmatpush2.msra.mxu0 0.0
        %306 = vmatprep.subr.mxu0 0.0
        %307 = vmatpush2.msra.mxu0 0.0
        %308 = vmatprep.subr.mxu0 0.0
        %309 = vmatpush2.msra.mxu0 0.0
        %310 = vmatprep.subr.mxu0 0.0
        %311 = vmatpush2.msra.mxu0 0.0
        %312 = vmatprep.subr.mxu0 0.0
        %313 = vmatpush2.msra.mxu0 0.0
        %314 = vmatprep.subr.mxu0 0.0
        %315 = vmatpush2.msra.mxu0 0.0
        %316 = vmatprep.subr.mxu0 0.0
        %317 = vmatpush2.msra.mxu0 0.0
        %318 = vmatprep.subr.mxu0 0.0
        %319 = vmatpush2.msra.mxu0 0.0
        %320 = vmatprep.mubr.f32.mxu0 0.0
        %321 = vmatmul.mubr.f32.gmra.mxu0 %v245
        %v322 = vpop.f32.mrf.mxu0
        %v323 = vadd.f32 0.0, %v322
        %v324 = vpop.f32.mrf.mxu0
        %325 = vmatprep.mubr.f32.mxu0 0.0
        %326 = vmatmul.mubr.f32.gmra.mxu0 %v248
        %v327 = vpop.f32.mrf.mxu0
        %v328 = vadd.f32 0.0, %v327
        %v329 = vpop.f32.mrf.mxu0
        %330 = vmatprep.mubr.f32.mxu0 0.0
        %331 = vmatmul.mubr.f32.gmra.mxu0 %v251
        %v332 = vpop.f32.mrf.mxu0
        %v333 = vadd.f32 0.0, %v332
        %v334 = vpop.f32.mrf.mxu0
        %335 = vmatprep.mubr.f32.mxu0 0.0
        %336 = vmatmul.mubr.f32.gmra.mxu0 %v254
        %v337 = vpop.f32.mrf.mxu0
        %v338 = vadd.f32 0.0, %v337
        %v339 = vpop.f32.mrf.mxu0
        %340 = vdwg.mxu0
        %vm341 = vcmask 64512
        %342 = vst.msk [vmem:[%s169] sm:$0xff] %vm341, %v323
        %343 = vst.msk [vmem:[%s169 + $0x8] sm:$0xff] %vm341, %v328
        %344 = vst.msk [vmem:[%s169 + $0x10] sm:$0xff] %vm341, %v333
        %345 = vst.msk [vmem:[%s169 + $0x18] sm:$0xff] %vm341, %v338
        %s346 = sand.u32 %s81, 1
        %s347 = scalar_lea.sflag [#allocation7], %s346
        %s348 = sand.u32 %s81, 1
        %s349 = smul.addr %s348, 32
        %s350 = scalar_lea.vmem [#allocation8], %s349
        // Predicated region
        $region33: #{tpu_custom_call.1} parent=27 // pred_check
          %p351 = pneg %p91
        $region34: #{tpu_custom_call.1} parent=27 // pred_check_branch
          %353 = sbr.rel (%p351) target = $region36
        $region35: #{tpu_custom_call.1} parent=27 // pred_region
          %s354 = smul.u32 4, %s26
          %s356 = ssub.s32 512, 512
          %357 = vsyncadd %s347, %s356
          %s358 = smul.addr %s354, 128
          %s359 = scalar_lea.hbm %s3, %s358
          %s360 = sshll.u32 %s350, 4
          %s361 = int_to_ptr.vmem [resolvable:$true] %s360
          %366 = dma.vmem_to_hbm [thread:$0]  %s361, 512, %s359, %s347, 128, 128, 8
        $region36: #{tpu_custom_call.1} parent=27 // pred_fallthru
          _
      $region28: #{tpu_custom_call.1} parent=5 // pred_fallthru
        _
      %p367 = scmp.le.s32.totalorder 2, %s21
      // Predicated region
      $region37: #{tpu_custom_call.1} parent=5 // pred_check
        %p368 = pneg %p367
      $region38: #{tpu_custom_call.1} parent=5 // pred_check_branch
        %370 = sbr.rel (%p368) target = $region40
      $region39: #{tpu_custom_call.1} parent=5 // pred_region
        %s371 = ssub.s32 %s21, 2
        // Predicated region
        $region41: #{tpu_custom_call.1} parent=39 // pred_check
          %p372 = pneg %p97
        $region42: #{tpu_custom_call.1} parent=39 // pred_check_branch
          %374 = sbr.rel (%p372) target = $region44
        $region43: #{tpu_custom_call.1} parent=39 // pred_region
          %s375 = sand.u32 %s82, 1
          %s376 = scalar_lea.sflag [#allocation7], %s375
          %s377 = sand.u32 %s82, 1
          %s378 = smul.addr %s377, 32
          %s379 = scalar_lea.vmem [#allocation8], %s378
          %380 = dma.done %s376, 512
        $region44: #{tpu_custom_call.1} parent=39 // pred_fallthru
          _
      $region40: #{tpu_custom_call.1} parent=5 // pred_fallthru
        _
    $region6: #{tpu_custom_call.1} parent=1 // loop_footer
      %s25 = sadd.s32 1, %s21
    $region7: #{tpu_custom_call.1} parent=1 // loop_footer_branch
      %20 = sbr.rel target = $region3
    $region8: #{tpu_custom_call.1} parent=1 // loop_exit
      _
    %381 = vsyncpa [#allocation6], 1
    %s382 = scalar_lea.sflag [#allocation6], 1
    %383 = vsyncpa %s382, 1
    %384 = vsyncpa [#allocation7], 1
    %s385 = scalar_lea.sflag [#allocation7], 1
    %386 = vsyncpa %s385, 1

</llo_original>
